<compile_context>
chip_gen: v5e
topology: v5e:2x2
jax: 0.10.0
libtpu: 0.0.40
codegen_flags: <defaults>
</compile_context>

<pallas_src>
import jax
import jax.numpy as jnp
from jax.experimental import pallas as pl
from jax.experimental.pallas import tpu as pltpu

PAD_token = 0
MXU_ROWS = 128      # max batch rows per tile (MXU LHS row dimension)


def _round_up(x, m):
    return ((x + m - 1) // m) * m


def _choose_tile_b(batch):
    """Batch rows per grid step: sublane-aligned, capped at the MXU row dim,
    and (when the batch allows) >= 2 tiles so v7x's two TensorCores both get
    a "parallel" batch tile."""
    b8 = _round_up(batch, 8)
    if b8 <= 8:
        return 8
    return min(MXU_ROWS, _round_up((b8 + 1) // 2, 8))


def lstm_disc_kernel(x_ref, wih_ref, whh_ref, b_ref, addn_ref,
                     wl_h_ref, wl_a_ref, bl_ref, out_ref, gx_ref):
    """One batch tile of the full forward pass.

    x_ref    : (T, TB, E)   bf16  embedded tokens, sequence-major
    wih_ref  : (E, 4H)      bf16  gate-concatenated input->gate weights (i,f,g,o)
    whh_ref  : (H, 4H)      f32   gate-concatenated hidden->gate weights
    b_ref    : (1, 4H)      f32   b_ih + b_hh, gate-concatenated
    addn_ref : (TB, A_pad)  f32   additional features (zero-padded to 128 lanes)
    wl_h_ref : (1, H)       f32   classifier weights acting on the hidden part
    wl_a_ref : (1, A_pad)   f32   classifier weights acting on the addn part
    bl_ref   : (1, 1)       f32   classifier bias
    out_ref  : (TB, 1)      f32   sigmoid(label logits)
    gx_ref   : (T*TB, 4H)   f32   VMEM scratch: hoisted input projection
    """
    T, TB, E = x_ref.shape
    H = whh_ref.shape[0]
    H4 = 4 * H

    # ---- fused input projection, hoisted out of the recurrence --------------
    # Single big (T*TB, E) x (E, 4H) bf16 MXU matmul; bias folded in; result
    # lands in a VMEM scratch so the per-step values are not all live in vregs.
    x_flat = x_ref[...].reshape(T * TB, E)
    gx_ref[...] = (jnp.dot(x_flat, wih_ref[...],
                           preferred_element_type=jnp.float32)
                   + b_ref[...])

    # ---- loop-invariant values, hoisted once ---------------------------------
    whh = whh_ref[...]                                    # (H, 4H) f32
    lane = jax.lax.broadcasted_iota(jnp.int32, (TB, H4), 1)
    is_g = (lane >= 2 * H) & (lane < 3 * H)               # tanh lanes (g gate)

    def step(t, carry):
        h, c = carry                                      # f32 (TB, H) each
        lo = pl.multiple_of(t * TB, TB)
        # ONE recurrent MXU matmul per step covering all four gates.
        gates = gx_ref[pl.ds(lo, TB), :] + jnp.dot(
            h, whh, preferred_element_type=jnp.float32)   # (TB, 4H) f32
        nl = jnp.where(is_g, jnp.tanh(gates), jax.nn.sigmoid(gates))
        i_t = nl[:, 0 * H:1 * H]
        f_t = nl[:, 1 * H:2 * H]
        g_t = nl[:, 2 * H:3 * H]
        o_t = nl[:, 3 * H:4 * H]
        c_new = f_t * c + i_t * g_t
        h_new = o_t * jnp.tanh(c_new)
        return h_new, c_new

    h0 = jnp.zeros((TB, H), jnp.float32)
    c0 = jnp.zeros((TB, H), jnp.float32)
    # TODO(synk): on v5e/v6e keep the fused W_hh RHS resident in the MXU across
    # the recurrence via pltpu.matmul_push_rhs / matmul_acc_lhs / matmul_pop;
    # kept as a portable jnp.dot here.
    h, _ = jax.lax.fori_loop(0, T, step, (h0, c0), unroll=min(T, 8))

    # ---- classifier head: concat([h, addn]) @ W^T + b as VPU mul + lane-reduce
    # (no 1-lane-output MXU matmuls in the epilogue)
    logits = (jnp.sum(h * wl_h_ref[...], axis=-1, keepdims=True)
              + jnp.sum(addn_ref[...] * wl_a_ref[...], axis=-1, keepdims=True)
              + bl_ref[...])
    # NOTE: at TILE_B >= 128 a lane-dense (1, TILE_B) output block would avoid
    # the masked column store; with a single store per recurrence it is noise.
    out_ref[...] = jax.nn.sigmoid(logits)                 # (TB, 1)


def init_params(key, vocab_size, embedding_dim, hidden_dim,
                label_size=1, num_addn_feat=3):
    ks = jax.random.split(key, 8)
    scale = 0.1
    embedding = scale * jax.random.normal(ks[0], (vocab_size, embedding_dim), jnp.float32)
    embedding = embedding.at[PAD_token].set(0.0)          # padding_idx=PAD_token
    w_ih = scale * jax.random.normal(ks[1], (4 * hidden_dim, embedding_dim), jnp.float32)
    w_hh = scale * jax.random.normal(ks[2], (4 * hidden_dim, hidden_dim), jnp.float32)
    b_ih = scale * jax.random.normal(ks[3], (4 * hidden_dim,), jnp.float32)
    b_hh = scale * jax.random.normal(ks[4], (4 * hidden_dim,), jnp.float32)
    w_lin = scale * jax.random.normal(ks[5], (label_size, hidden_dim + num_addn_feat), jnp.float32)
    b_lin = scale * jax.random.normal(ks[6], (label_size,), jnp.float32)
    return dict(embedding=embedding, w_ih=w_ih, w_hh=w_hh, b_ih=b_ih, b_hh=b_hh,
                w_lin=w_lin, b_lin=b_lin)


def discriminator_forward(sentence, addn_feats, params, hidden_dim, num_addn_feat):
    """sentence: (T, B) int32 token ids; addn_feats: (B, num_addn_feat) float32."""
    T, B = sentence.shape
    H = hidden_dim
    A = num_addn_feat

    # Embedding lookup (gather) is glue outside the kernel; view(T, B, -1) is
    # already the sequence-major (T, B, E) layout.
    emb = params["embedding"][sentence]                            # (T, B, E) f32
    E = emb.shape[-1]

    TILE_B = _choose_tile_b(B)
    B_pad = _round_up(B, TILE_B)

    # bf16 activations: halves the streamed x DMA bytes + its VMEM footprint.
    emb_p = jnp.zeros((T, B_pad, E), jnp.bfloat16).at[:, :B, :].set(
        emb.astype(jnp.bfloat16))

    # Pad the additional-feature width to a full 128-lane tile; matching
    # classifier lanes are zero, so the padding is an exact no-op.
    A_pad = 128
    addn_p = jnp.zeros((B_pad, A_pad), jnp.float32).at[:B, :A].set(
        addn_feats.astype(jnp.float32))

    # Gate-concatenated (i, f, g, o) pre-transposed weights.  RHS lane dim is
    # 4H, so 4H = 128 fills a full lane tile.  W_ih ships bf16 (throughput);
    # W_hh stays f32 so the recurrent state never gets recast to bf16.
    wih_cat = params["w_ih"].T.astype(jnp.bfloat16)                # (E, 4H)
    whh_cat = params["w_hh"].T.astype(jnp.float32)                 # (H, 4H)
    bias_cat = (params["b_ih"] + params["b_hh"]).reshape(1, 4 * H).astype(jnp.float32)

    wl = params["w_lin"].astype(jnp.float32)                       # (1, H + A)
    wl_h = wl[:, :H]                                               # (1, H)
    wl_a = jnp.zeros((1, A_pad), jnp.float32).at[:, :A].set(wl[:, H:])
    bl = params["b_lin"].reshape(1, 1).astype(jnp.float32)

    # NOTE(v7x): for long T / big E, add an inner "arbitrary" T-chunk axis (or
    # pltpu.emit_pipeline over T) so the x block + gx scratch stay bounded under
    # the 64 MiB VMEM, and single-buffer the constant weight operands
    # (pipeline_mode=pl.Buffered(1)) once H is large.  Unnecessary at these shapes.
    grid = (B_pad // TILE_B,)
    out_p = pl.pallas_call(
        lstm_disc_kernel,
        out_shape=jax.ShapeDtypeStruct((B_pad, 1), jnp.float32),
        grid=grid,
        in_specs=[
            pl.BlockSpec((T, TILE_B, E), lambda bt: (0, bt, 0)),   # x, batch-tiled
            pl.BlockSpec((E, 4 * H), lambda bt: (0, 0)),           # W_ih (gate-concat)
            pl.BlockSpec((H, 4 * H), lambda bt: (0, 0)),           # W_hh (gate-concat)
            pl.BlockSpec((1, 4 * H), lambda bt: (0, 0)),           # b_ih + b_hh
            pl.BlockSpec((TILE_B, A_pad), lambda bt: (bt, 0)),     # addn feats
            pl.BlockSpec((1, H), lambda bt: (0, 0)),               # W_lin hidden part
            pl.BlockSpec((1, A_pad), lambda bt: (0, 0)),           # W_lin addn part
            pl.BlockSpec((1, 1), lambda bt: (0, 0)),               # b_lin
        ],
        out_specs=pl.BlockSpec((TILE_B, 1), lambda bt: (bt, 0)),
        scratch_shapes=[pltpu.VMEM((T * TILE_B, 4 * H), jnp.float32)],
        compiler_params=pltpu.CompilerParams(
            dimension_semantics=("parallel",),      # batch tiles -> 2 TCs on v7x
            vmem_limit_bytes=32 * 1024 * 1024,
        ),
    )(emb_p, wih_cat, whh_cat, bias_cat, addn_p, wl_h, wl_a, bl)
    return out_p[:B]


def reference_forward(sentence, addn_feats, params, hidden_dim):
    """Pure-JAX f32 reference mirroring the PyTorch semantics."""
    H = hidden_dim
    emb = params["embedding"][sentence]                    # (T, B, E)
    T, B, _ = emb.shape
    h = jnp.zeros((B, H), jnp.float32)
    c = jnp.zeros((B, H), jnp.float32)
    for t in range(T):
        gates = emb[t] @ params["w_ih"].T + params["b_ih"] + h @ params["w_hh"].T + params["b_hh"]
        i = jax.nn.sigmoid(gates[:, 0 * H:1 * H])
        f = jax.nn.sigmoid(gates[:, 1 * H:2 * H])
        g = jnp.tanh(gates[:, 2 * H:3 * H])
        o = jax.nn.sigmoid(gates[:, 3 * H:4 * H])
        c = f * c + i * g
        h = o * jnp.tanh(c)
    feat = jnp.concatenate([h, addn_feats], axis=1)
    return jax.nn.sigmoid(feat @ params["w_lin"].T + params["b_lin"])


if __name__ == "__main__":
    # Small, module-consistent shapes.
    vocab_size = 32
    embedding_dim = 16
    hidden_dim = 32
    label_size = 1
    batch_size = 2
    num_addn_feat = 3
    seq_len = 8

    key = jax.random.PRNGKey(0)
    k_par, k_sent, k_feat = jax.random.split(key, 3)

    params = init_params(k_par, vocab_size, embedding_dim, hidden_dim,
                         label_size=label_size, num_addn_feat=num_addn_feat)

    sentence = jax.random.randint(k_sent, (seq_len, batch_size), 0, vocab_size, dtype=jnp.int32)
    addn_feats = jax.random.normal(k_feat, (batch_size, num_addn_feat), jnp.float32)

    out = discriminator_forward(sentence, addn_feats, params, hidden_dim, num_addn_feat)
    out = jax.block_until_ready(out)

    ref = reference_forward(sentence, addn_feats, params, hidden_dim)
    assert out.shape == (batch_size, label_size), out.shape
    # bf16 activations / W_ih in the kernel vs the f32 reference -> loosened tolerance.
    assert jnp.allclose(out, ref, atol=2e-2, rtol=2e-2), (out, ref)

    print("KERNEL_OK")
</pallas_src>

<mosaic_0001>
module attributes {stable_mosaic.version = 11 : i64} {
  func.func @lstm_disc_kernel(%arg0: i32, %arg1: memref<8x8x16xbf16, #tpu.memory_space<vmem>>, %arg2: memref<16x128xbf16, #tpu.memory_space<vmem>>, %arg3: memref<32x128xf32, #tpu.memory_space<vmem>>, %arg4: memref<1x128xf32, #tpu.memory_space<vmem>>, %arg5: memref<8x128xf32, #tpu.memory_space<vmem>>, %arg6: memref<1x32xf32, #tpu.memory_space<vmem>>, %arg7: memref<1x128xf32, #tpu.memory_space<vmem>>, %arg8: memref<1x1xf32, #tpu.memory_space<vmem>>, %arg9: memref<8x1xf32, #tpu.memory_space<vmem>>, %arg10: memref<64x128xf32, #tpu.memory_space<vmem>>) attributes {dimension_semantics = [#tpu.dimension_semantics<parallel>], iteration_bounds = array<i64: 1>, scalar_prefetch = 0 : i64, scratch_operands = 1 : i64, tpu.core_type = #tpu.core_type<tc>, window_params = [{transform_indices = @transform_0, window_bounds = array<i64: 8, 8, 16>}, {pipeline_mode = #tpu.pipeline_mode<synchronous>, transform_indices = @transform_1, window_bounds = array<i64: 16, 128>}, {pipeline_mode = #tpu.pipeline_mode<synchronous>, transform_indices = @transform_2, window_bounds = array<i64: 32, 128>}, {pipeline_mode = #tpu.pipeline_mode<synchronous>, transform_indices = @transform_3, window_bounds = array<i64: 1, 128>}, {transform_indices = @transform_4, window_bounds = array<i64: 8, 128>}, {pipeline_mode = #tpu.pipeline_mode<synchronous>, transform_indices = @transform_5, window_bounds = array<i64: 1, 32>}, {pipeline_mode = #tpu.pipeline_mode<synchronous>, transform_indices = @transform_6, window_bounds = array<i64: 1, 128>}, {pipeline_mode = #tpu.pipeline_mode<synchronous>, transform_indices = @transform_7, window_bounds = array<i64: 1, 1>}, {transform_indices = @transform_8, window_bounds = array<i64: 8, 1>}]} {
    %c0 = arith.constant 0 : index
    %c0_0 = arith.constant 0 : index
    %c0_1 = arith.constant 0 : index
    %0 = vector.load %arg1[%c0, %c0_0, %c0_1] : memref<8x8x16xbf16, #tpu.memory_space<vmem>>, vector<8x8x16xbf16>
    %1 = vector.shape_cast %0 : vector<8x8x16xbf16> to vector<64x16xbf16>
    %c0_2 = arith.constant 0 : index
    %c0_3 = arith.constant 0 : index
    %2 = vector.load %arg2[%c0_2, %c0_3] : memref<16x128xbf16, #tpu.memory_space<vmem>>, vector<16x128xbf16>
    %cst = arith.constant dense<0.000000e+00> : vector<64x128xf32>
    %3 = tpu.matmul %1, %2, %cst {dimension_numbers = #tpu.dot_dimension_numbers<[1], [0], [0], [1], [0, 0, 1, 1], [], []>} : vector<64x16xbf16>, vector<16x128xbf16>, vector<64x128xf32> -> vector<64x128xf32>
    %c0_4 = arith.constant 0 : index
    %c0_5 = arith.constant 0 : index
    %4 = vector.load %arg4[%c0_4, %c0_5] : memref<1x128xf32, #tpu.memory_space<vmem>>, vector<1x128xf32>
    %5 = vector.broadcast %4 : vector<1x128xf32> to vector<64x128xf32>
    %6 = arith.addf %3, %5 : vector<64x128xf32>
    %c0_6 = arith.constant 0 : index
    %c0_7 = arith.constant 0 : index
    %7 = vector.load %arg10[%c0_6, %c0_7] : memref<64x128xf32, #tpu.memory_space<vmem>>, vector<64x128xf32>
    tpu.vector_store %arg10[%c0_6, %c0_7], %6 {strides = array<i32>} : memref<64x128xf32, #tpu.memory_space<vmem>>, vector<64x128xf32>,
    %c0_8 = arith.constant 0 : index
    %c0_9 = arith.constant 0 : index
    %8 = vector.load %arg3[%c0_8, %c0_9] : memref<32x128xf32, #tpu.memory_space<vmem>>, vector<32x128xf32>
    %9 = tpu.iota {dimensions = array<i32: 1>} : vector<8x128xi32>
    %c64_i32 = arith.constant 64 : i32
    %10 = vector.broadcast %c64_i32 : i32 to vector<8x128xi32>
    %11 = arith.cmpi sge, %9, %10 : vector<8x128xi32>
    %c96_i32 = arith.constant 96 : i32
    %12 = vector.broadcast %c96_i32 : i32 to vector<8x128xi32>
    %13 = arith.cmpi slt, %9, %12 : vector<8x128xi32>
    %14 = arith.andi %11, %13 : vector<8x128xi1>
    %cst_10 = arith.constant 0.000000e+00 : f32
    %15 = vector.broadcast %cst_10 : f32 to vector<8x32xf32>
    %cst_11 = arith.constant 0.000000e+00 : f32
    %16 = vector.broadcast %cst_11 : f32 to vector<8x32xf32>
    %c0_i32 = arith.constant 0 : i32
    %c8_i32 = arith.constant 8 : i32
    %17 = arith.muli %c0_i32, %c8_i32 : i32
    %18 = tpu.assume_multiple %17, 8 : i32
    %19 = arith.index_cast %18 : i32 to index
    %c0_12 = arith.constant 0 : index
    %20 = vector.load %arg10[%19, %c0_12] : memref<64x128xf32, #tpu.memory_space<vmem>>, vector<8x128xf32>
    %cst_13 = arith.constant dense<0.000000e+00> : vector<8x128xf32>
    %21 = tpu.matmul %15, %8, %cst_13 {dimension_numbers = #tpu.dot_dimension_numbers<[1], [0], [0], [1], [0, 0, 1, 1], [], []>} : vector<8x32xf32>, vector<32x128xf32>, vector<8x128xf32> -> vector<8x128xf32>
    %22 = arith.addf %20, %21 : vector<8x128xf32>
    %23 = math.tanh %22 : vector<8x128xf32>
    %24 = arith.negf %22 : vector<8x128xf32>
    %25 = math.exp %24 : vector<8x128xf32>
    %cst_14 = arith.constant 1.000000e+00 : f32
    %26 = vector.broadcast %cst_14 : f32 to vector<8x128xf32>
    %27 = arith.addf %26, %25 : vector<8x128xf32>
    %28 = arith.divf %26, %27 : vector<8x128xf32>
    %29 = arith.select %14, %23, %28 : vector<8x128xi1>, vector<8x128xf32>
    %30 = vector.extract_strided_slice %29 {offsets = [0, 0], sizes = [8, 32], strides = [1, 1]} : vector<8x128xf32> to vector<8x32xf32>
    %31 = vector.extract_strided_slice %29 {offsets = [0, 32], sizes = [8, 32], strides = [1, 1]} : vector<8x128xf32> to vector<8x32xf32>
    %32 = vector.extract_strided_slice %29 {offsets = [0, 64], sizes = [8, 32], strides = [1, 1]} : vector<8x128xf32> to vector<8x32xf32>
    %33 = vector.extract_strided_slice %29 {offsets = [0, 96], sizes = [8, 32], strides = [1, 1]} : vector<8x128xf32> to vector<8x32xf32>
    %34 = arith.mulf %31, %16 : vector<8x32xf32>
    %35 = arith.mulf %30, %32 : vector<8x32xf32>
    %36 = arith.addf %34, %35 : vector<8x32xf32>
    %37 = math.tanh %36 : vector<8x32xf32>
    %38 = arith.mulf %33, %37 : vector<8x32xf32>
    %c1_i32 = arith.constant 1 : i32
    %c8_i32_15 = arith.constant 8 : i32
    %39 = arith.muli %c1_i32, %c8_i32_15 : i32
    %40 = tpu.assume_multiple %39, 8 : i32
    %41 = arith.index_cast %40 : i32 to index
    %c0_16 = arith.constant 0 : index
    %42 = vector.load %arg10[%41, %c0_16] : memref<64x128xf32, #tpu.memory_space<vmem>>, vector<8x128xf32>
    %cst_17 = arith.constant dense<0.000000e+00> : vector<8x128xf32>
    %43 = tpu.matmul %38, %8, %cst_17 {dimension_numbers = #tpu.dot_dimension_numbers<[1], [0], [0], [1], [0, 0, 1, 1], [], []>} : vector<8x32xf32>, vector<32x128xf32>, vector<8x128xf32> -> vector<8x128xf32>
    %44 = arith.addf %42, %43 : vector<8x128xf32>
    %45 = math.tanh %44 : vector<8x128xf32>
    %46 = arith.negf %44 : vector<8x128xf32>
    %47 = math.exp %46 : vector<8x128xf32>
    %cst_18 = arith.constant 1.000000e+00 : f32
    %48 = vector.broadcast %cst_18 : f32 to vector<8x128xf32>
    %49 = arith.addf %48, %47 : vector<8x128xf32>
    %50 = arith.divf %48, %49 : vector<8x128xf32>
    %51 = arith.select %14, %45, %50 : vector<8x128xi1>, vector<8x128xf32>
    %52 = vector.extract_strided_slice %51 {offsets = [0, 0], sizes = [8, 32], strides = [1, 1]} : vector<8x128xf32> to vector<8x32xf32>
    %53 = vector.extract_strided_slice %51 {offsets = [0, 32], sizes = [8, 32], strides = [1, 1]} : vector<8x128xf32> to vector<8x32xf32>
    %54 = vector.extract_strided_slice %51 {offsets = [0, 64], sizes = [8, 32], strides = [1, 1]} : vector<8x128xf32> to vector<8x32xf32>
    %55 = vector.extract_strided_slice %51 {offsets = [0, 96], sizes = [8, 32], strides = [1, 1]} : vector<8x128xf32> to vector<8x32xf32>
    %56 = arith.mulf %53, %36 : vector<8x32xf32>
    %57 = arith.mulf %52, %54 : vector<8x32xf32>
    %58 = arith.addf %56, %57 : vector<8x32xf32>
    %59 = math.tanh %58 : vector<8x32xf32>
    %60 = arith.mulf %55, %59 : vector<8x32xf32>
    %c2_i32 = arith.constant 2 : i32
    %c8_i32_19 = arith.constant 8 : i32
    %61 = arith.muli %c2_i32, %c8_i32_19 : i32
    %62 = tpu.assume_multiple %61, 8 : i32
    %63 = arith.index_cast %62 : i32 to index
    %c0_20 = arith.constant 0 : index
    %64 = vector.load %arg10[%63, %c0_20] : memref<64x128xf32, #tpu.memory_space<vmem>>, vector<8x128xf32>
    %cst_21 = arith.constant dense<0.000000e+00> : vector<8x128xf32>
    %65 = tpu.matmul %60, %8, %cst_21 {dimension_numbers = #tpu.dot_dimension_numbers<[1], [0], [0], [1], [0, 0, 1, 1], [], []>} : vector<8x32xf32>, vector<32x128xf32>, vector<8x128xf32> -> vector<8x128xf32>
    %66 = arith.addf %64, %65 : vector<8x128xf32>
    %67 = math.tanh %66 : vector<8x128xf32>
    %68 = arith.negf %66 : vector<8x128xf32>
    %69 = math.exp %68 : vector<8x128xf32>
    %cst_22 = arith.constant 1.000000e+00 : f32
    %70 = vector.broadcast %cst_22 : f32 to vector<8x128xf32>
    %71 = arith.addf %70, %69 : vector<8x128xf32>
    %72 = arith.divf %70, %71 : vector<8x128xf32>
    %73 = arith.select %14, %67, %72 : vector<8x128xi1>, vector<8x128xf32>
    %74 = vector.extract_strided_slice %73 {offsets = [0, 0], sizes = [8, 32], strides = [1, 1]} : vector<8x128xf32> to vector<8x32xf32>
    %75 = vector.extract_strided_slice %73 {offsets = [0, 32], sizes = [8, 32], strides = [1, 1]} : vector<8x128xf32> to vector<8x32xf32>
    %76 = vector.extract_strided_slice %73 {offsets = [0, 64], sizes = [8, 32], strides = [1, 1]} : vector<8x128xf32> to vector<8x32xf32>
    %77 = vector.extract_strided_slice %73 {offsets = [0, 96], sizes = [8, 32], strides = [1, 1]} : vector<8x128xf32> to vector<8x32xf32>
    %78 = arith.mulf %75, %58 : vector<8x32xf32>
    %79 = arith.mulf %74, %76 : vector<8x32xf32>
    %80 = arith.addf %78, %79 : vector<8x32xf32>
    %81 = math.tanh %80 : vector<8x32xf32>
    %82 = arith.mulf %77, %81 : vector<8x32xf32>
    %c3_i32 = arith.constant 3 : i32
    %c8_i32_23 = arith.constant 8 : i32
    %83 = arith.muli %c3_i32, %c8_i32_23 : i32
    %84 = tpu.assume_multiple %83, 8 : i32
    %85 = arith.index_cast %84 : i32 to index
    %c0_24 = arith.constant 0 : index
    %86 = vector.load %arg10[%85, %c0_24] : memref<64x128xf32, #tpu.memory_space<vmem>>, vector<8x128xf32>
    %cst_25 = arith.constant dense<0.000000e+00> : vector<8x128xf32>
    %87 = tpu.matmul %82, %8, %cst_25 {dimension_numbers = #tpu.dot_dimension_numbers<[1], [0], [0], [1], [0, 0, 1, 1], [], []>} : vector<8x32xf32>, vector<32x128xf32>, vector<8x128xf32> -> vector<8x128xf32>
    %88 = arith.addf %86, %87 : vector<8x128xf32>
    %89 = math.tanh %88 : vector<8x128xf32>
    %90 = arith.negf %88 : vector<8x128xf32>
    %91 = math.exp %90 : vector<8x128xf32>
    %cst_26 = arith.constant 1.000000e+00 : f32
    %92 = vector.broadcast %cst_26 : f32 to vector<8x128xf32>
    %93 = arith.addf %92, %91 : vector<8x128xf32>
    %94 = arith.divf %92, %93 : vector<8x128xf32>
    %95 = arith.select %14, %89, %94 : vector<8x128xi1>, vector<8x128xf32>
    %96 = vector.extract_strided_slice %95 {offsets = [0, 0], sizes = [8, 32], strides = [1, 1]} : vector<8x128xf32> to vector<8x32xf32>
    %97 = vector.extract_strided_slice %95 {offsets = [0, 32], sizes = [8, 32], strides = [1, 1]} : vector<8x128xf32> to vector<8x32xf32>
    %98 = vector.extract_strided_slice %95 {offsets = [0, 64], sizes = [8, 32], strides = [1, 1]} : vector<8x128xf32> to vector<8x32xf32>
    %99 = vector.extract_strided_slice %95 {offsets = [0, 96], sizes = [8, 32], strides = [1, 1]} : vector<8x128xf32> to vector<8x32xf32>
    %100 = arith.mulf %97, %80 : vector<8x32xf32>
    %101 = arith.mulf %96, %98 : vector<8x32xf32>
    %102 = arith.addf %100, %101 : vector<8x32xf32>
    %103 = math.tanh %102 : vector<8x32xf32>
    %104 = arith.mulf %99, %103 : vector<8x32xf32>
    %c4_i32 = arith.constant 4 : i32
    %c8_i32_27 = arith.constant 8 : i32
    %105 = arith.muli %c4_i32, %c8_i32_27 : i32
    %106 = tpu.assume_multiple %105, 8 : i32
    %107 = arith.index_cast %106 : i32 to index
    %c0_28 = arith.constant 0 : index
    %108 = vector.load %arg10[%107, %c0_28] : memref<64x128xf32, #tpu.memory_space<vmem>>, vector<8x128xf32>
    %cst_29 = arith.constant dense<0.000000e+00> : vector<8x128xf32>
    %109 = tpu.matmul %104, %8, %cst_29 {dimension_numbers = #tpu.dot_dimension_numbers<[1], [0], [0], [1], [0, 0, 1, 1], [], []>} : vector<8x32xf32>, vector<32x128xf32>, vector<8x128xf32> -> vector<8x128xf32>
    %110 = arith.addf %108, %109 : vector<8x128xf32>
    %111 = math.tanh %110 : vector<8x128xf32>
    %112 = arith.negf %110 : vector<8x128xf32>
    %113 = math.exp %112 : vector<8x128xf32>
    %cst_30 = arith.constant 1.000000e+00 : f32
    %114 = vector.broadcast %cst_30 : f32 to vector<8x128xf32>
    %115 = arith.addf %114, %113 : vector<8x128xf32>
    %116 = arith.divf %114, %115 : vector<8x128xf32>
    %117 = arith.select %14, %111, %116 : vector<8x128xi1>, vector<8x128xf32>
    %118 = vector.extract_strided_slice %117 {offsets = [0, 0], sizes = [8, 32], strides = [1, 1]} : vector<8x128xf32> to vector<8x32xf32>
    %119 = vector.extract_strided_slice %117 {offsets = [0, 32], sizes = [8, 32], strides = [1, 1]} : vector<8x128xf32> to vector<8x32xf32>
    %120 = vector.extract_strided_slice %117 {offsets = [0, 64], sizes = [8, 32], strides = [1, 1]} : vector<8x128xf32> to vector<8x32xf32>
    %121 = vector.extract_strided_slice %117 {offsets = [0, 96], sizes = [8, 32], strides = [1, 1]} : vector<8x128xf32> to vector<8x32xf32>
    %122 = arith.mulf %119, %102 : vector<8x32xf32>
    %123 = arith.mulf %118, %120 : vector<8x32xf32>
    %124 = arith.addf %122, %123 : vector<8x32xf32>
    %125 = math.tanh %124 : vector<8x32xf32>
    %126 = arith.mulf %121, %125 : vector<8x32xf32>
    %c5_i32 = arith.constant 5 : i32
    %c8_i32_31 = arith.constant 8 : i32
    %127 = arith.muli %c5_i32, %c8_i32_31 : i32
    %128 = tpu.assume_multiple %127, 8 : i32
    %129 = arith.index_cast %128 : i32 to index
    %c0_32 = arith.constant 0 : index
    %130 = vector.load %arg10[%129, %c0_32] : memref<64x128xf32, #tpu.memory_space<vmem>>, vector<8x128xf32>
    %cst_33 = arith.constant dense<0.000000e+00> : vector<8x128xf32>
    %131 = tpu.matmul %126, %8, %cst_33 {dimension_numbers = #tpu.dot_dimension_numbers<[1], [0], [0], [1], [0, 0, 1, 1], [], []>} : vector<8x32xf32>, vector<32x128xf32>, vector<8x128xf32> -> vector<8x128xf32>
    %132 = arith.addf %130, %131 : vector<8x128xf32>
    %133 = math.tanh %132 : vector<8x128xf32>
    %134 = arith.negf %132 : vector<8x128xf32>
    %135 = math.exp %134 : vector<8x128xf32>
    %cst_34 = arith.constant 1.000000e+00 : f32
    %136 = vector.broadcast %cst_34 : f32 to vector<8x128xf32>
    %137 = arith.addf %136, %135 : vector<8x128xf32>
    %138 = arith.divf %136, %137 : vector<8x128xf32>
    %139 = arith.select %14, %133, %138 : vector<8x128xi1>, vector<8x128xf32>
    %140 = vector.extract_strided_slice %139 {offsets = [0, 0], sizes = [8, 32], strides = [1, 1]} : vector<8x128xf32> to vector<8x32xf32>
    %141 = vector.extract_strided_slice %139 {offsets = [0, 32], sizes = [8, 32], strides = [1, 1]} : vector<8x128xf32> to vector<8x32xf32>
    %142 = vector.extract_strided_slice %139 {offsets = [0, 64], sizes = [8, 32], strides = [1, 1]} : vector<8x128xf32> to vector<8x32xf32>
    %143 = vector.extract_strided_slice %139 {offsets = [0, 96], sizes = [8, 32], strides = [1, 1]} : vector<8x128xf32> to vector<8x32xf32>
    %144 = arith.mulf %141, %124 : vector<8x32xf32>
    %145 = arith.mulf %140, %142 : vector<8x32xf32>
    %146 = arith.addf %144, %145 : vector<8x32xf32>
    %147 = math.tanh %146 : vector<8x32xf32>
    %148 = arith.mulf %143, %147 : vector<8x32xf32>
    %c6_i32 = arith.constant 6 : i32
    %c8_i32_35 = arith.constant 8 : i32
    %149 = arith.muli %c6_i32, %c8_i32_35 : i32
    %150 = tpu.assume_multiple %149, 8 : i32
    %151 = arith.index_cast %150 : i32 to index
    %c0_36 = arith.constant 0 : index
    %152 = vector.load %arg10[%151, %c0_36] : memref<64x128xf32, #tpu.memory_space<vmem>>, vector<8x128xf32>
    %cst_37 = arith.constant dense<0.000000e+00> : vector<8x128xf32>
    %153 = tpu.matmul %148, %8, %cst_37 {dimension_numbers = #tpu.dot_dimension_numbers<[1], [0], [0], [1], [0, 0, 1, 1], [], []>} : vector<8x32xf32>, vector<32x128xf32>, vector<8x128xf32> -> vector<8x128xf32>
    %154 = arith.addf %152, %153 : vector<8x128xf32>
    %155 = math.tanh %154 : vector<8x128xf32>
    %156 = arith.negf %154 : vector<8x128xf32>
    %157 = math.exp %156 : vector<8x128xf32>
    %cst_38 = arith.constant 1.000000e+00 : f32
    %158 = vector.broadcast %cst_38 : f32 to vector<8x128xf32>
    %159 = arith.addf %158, %157 : vector<8x128xf32>
    %160 = arith.divf %158, %159 : vector<8x128xf32>
    %161 = arith.select %14, %155, %160 : vector<8x128xi1>, vector<8x128xf32>
    %162 = vector.extract_strided_slice %161 {offsets = [0, 0], sizes = [8, 32], strides = [1, 1]} : vector<8x128xf32> to vector<8x32xf32>
    %163 = vector.extract_strided_slice %161 {offsets = [0, 32], sizes = [8, 32], strides = [1, 1]} : vector<8x128xf32> to vector<8x32xf32>
    %164 = vector.extract_strided_slice %161 {offsets = [0, 64], sizes = [8, 32], strides = [1, 1]} : vector<8x128xf32> to vector<8x32xf32>
    %165 = vector.extract_strided_slice %161 {offsets = [0, 96], sizes = [8, 32], strides = [1, 1]} : vector<8x128xf32> to vector<8x32xf32>
    %166 = arith.mulf %163, %146 : vector<8x32xf32>
    %167 = arith.mulf %162, %164 : vector<8x32xf32>
    %168 = arith.addf %166, %167 : vector<8x32xf32>
    %169 = math.tanh %168 : vector<8x32xf32>
    %170 = arith.mulf %165, %169 : vector<8x32xf32>
    %c7_i32 = arith.constant 7 : i32
    %c8_i32_39 = arith.constant 8 : i32
    %171 = arith.muli %c7_i32, %c8_i32_39 : i32
    %172 = tpu.assume_multiple %171, 8 : i32
    %173 = arith.index_cast %172 : i32 to index
    %c0_40 = arith.constant 0 : index
    %174 = vector.load %arg10[%173, %c0_40] : memref<64x128xf32, #tpu.memory_space<vmem>>, vector<8x128xf32>
    %cst_41 = arith.constant dense<0.000000e+00> : vector<8x128xf32>
    %175 = tpu.matmul %170, %8, %cst_41 {dimension_numbers = #tpu.dot_dimension_numbers<[1], [0], [0], [1], [0, 0, 1, 1], [], []>} : vector<8x32xf32>, vector<32x128xf32>, vector<8x128xf32> -> vector<8x128xf32>
    %176 = arith.addf %174, %175 : vector<8x128xf32>
    %177 = math.tanh %176 : vector<8x128xf32>
    %178 = arith.negf %176 : vector<8x128xf32>
    %179 = math.exp %178 : vector<8x128xf32>
    %cst_42 = arith.constant 1.000000e+00 : f32
    %180 = vector.broadcast %cst_42 : f32 to vector<8x128xf32>
    %181 = arith.addf %180, %179 : vector<8x128xf32>
    %182 = arith.divf %180, %181 : vector<8x128xf32>
    %183 = arith.select %14, %177, %182 : vector<8x128xi1>, vector<8x128xf32>
    %184 = vector.extract_strided_slice %183 {offsets = [0, 0], sizes = [8, 32], strides = [1, 1]} : vector<8x128xf32> to vector<8x32xf32>
    %185 = vector.extract_strided_slice %183 {offsets = [0, 32], sizes = [8, 32], strides = [1, 1]} : vector<8x128xf32> to vector<8x32xf32>
    %186 = vector.extract_strided_slice %183 {offsets = [0, 64], sizes = [8, 32], strides = [1, 1]} : vector<8x128xf32> to vector<8x32xf32>
    %187 = vector.extract_strided_slice %183 {offsets = [0, 96], sizes = [8, 32], strides = [1, 1]} : vector<8x128xf32> to vector<8x32xf32>
    %188 = arith.mulf %185, %168 : vector<8x32xf32>
    %189 = arith.mulf %184, %186 : vector<8x32xf32>
    %190 = arith.addf %188, %189 : vector<8x32xf32>
    %191 = math.tanh %190 : vector<8x32xf32>
    %192 = arith.mulf %187, %191 : vector<8x32xf32>
    %c8_i32_43 = arith.constant 8 : i32
    %c0_44 = arith.constant 0 : index
    %c0_45 = arith.constant 0 : index
    %193 = vector.load %arg6[%c0_44, %c0_45] : memref<1x32xf32, #tpu.memory_space<vmem>>, vector<1x32xf32>
    %194 = vector.broadcast %193 : vector<1x32xf32> to vector<8x32xf32>
    %195 = arith.mulf %192, %194 : vector<8x32xf32>
    %cst_46 = arith.constant dense<0.000000e+00> : vector<8xf32>
    %196 = vector.multi_reduction <add>, %195, %cst_46 [1] : vector<8x32xf32> to vector<8xf32>
    %197 = vector.shape_cast %196 : vector<8xf32> to vector<8x1xf32>
    %c0_47 = arith.constant 0 : index
    %c0_48 = arith.constant 0 : index
    %198 = vector.load %arg5[%c0_47, %c0_48] : memref<8x128xf32, #tpu.memory_space<vmem>>, vector<8x128xf32>
    %c0_49 = arith.constant 0 : index
    %c0_50 = arith.constant 0 : index
    %199 = vector.load %arg7[%c0_49, %c0_50] : memref<1x128xf32, #tpu.memory_space<vmem>>, vector<1x128xf32>
    %200 = vector.broadcast %199 : vector<1x128xf32> to vector<8x128xf32>
    %201 = arith.mulf %198, %200 : vector<8x128xf32>
    %cst_51 = arith.constant dense<0.000000e+00> : vector<8xf32>
    %202 = vector.multi_reduction <add>, %201, %cst_51 [1] : vector<8x128xf32> to vector<8xf32>
    %203 = vector.shape_cast %202 : vector<8xf32> to vector<8x1xf32>
    %204 = arith.addf %197, %203 : vector<8x1xf32>
    %c0_52 = arith.constant 0 : index
    %c0_53 = arith.constant 0 : index
    %205 = vector.load %arg8[%c0_52, %c0_53] : memref<1x1xf32, #tpu.memory_space<vmem>>, vector<1x1xf32>
    %206 = vector.broadcast %205 : vector<1x1xf32> to vector<8x1xf32>
    %207 = arith.addf %204, %206 : vector<8x1xf32>
    %208 = arith.negf %207 : vector<8x1xf32>
    %209 = math.exp %208 : vector<8x1xf32>
    %cst_54 = arith.constant 1.000000e+00 : f32
    %210 = vector.broadcast %cst_54 : f32 to vector<8x1xf32>
    %211 = arith.addf %210, %209 : vector<8x1xf32>
    %212 = arith.divf %210, %211 : vector<8x1xf32>
    %c0_55 = arith.constant 0 : index
    %c0_56 = arith.constant 0 : index
    %213 = vector.load %arg9[%c0_55, %c0_56] : memref<8x1xf32, #tpu.memory_space<vmem>>, vector<8x1xf32>
    tpu.vector_store %arg9[%c0_55, %c0_56], %212 {strides = array<i32>} : memref<8x1xf32, #tpu.memory_space<vmem>>, vector<8x1xf32>,
    return
  }
  func.func @transform_0(%arg0: i32) -> (i32, i32, i32) {
    %c0_i32 = arith.constant 0 : i32
    %c0_i32_0 = arith.constant 0 : i32
    %c0_i32_1 = arith.constant 0 : i32
    return %c0_i32, %arg0, %c0_i32_0 : i32, i32, i32
  }
  func.func @transform_1(%arg0: i32) -> (i32, i32) {
    %c0_i32 = arith.constant 0 : i32
    %c0_i32_0 = arith.constant 0 : i32
    %c0_i32_1 = arith.constant 0 : i32
    return %c0_i32, %c0_i32_0 : i32, i32
  }
  func.func @transform_2(%arg0: i32) -> (i32, i32) {
    %c0_i32 = arith.constant 0 : i32
    %c0_i32_0 = arith.constant 0 : i32
    %c0_i32_1 = arith.constant 0 : i32
    return %c0_i32, %c0_i32_0 : i32, i32
  }
  func.func @transform_3(%arg0: i32) -> (i32, i32) {
    %c0_i32 = arith.constant 0 : i32
    %c0_i32_0 = arith.constant 0 : i32
    %c0_i32_1 = arith.constant 0 : i32
    return %c0_i32, %c0_i32_0 : i32, i32
  }
  func.func @transform_4(%arg0: i32) -> (i32, i32) {
    %c0_i32 = arith.constant 0 : i32
    %c0_i32_0 = arith.constant 0 : i32
    return %arg0, %c0_i32 : i32, i32
  }
  func.func @transform_5(%arg0: i32) -> (i32, i32) {
    %c0_i32 = arith.constant 0 : i32
    %c0_i32_0 = arith.constant 0 : i32
    %c0_i32_1 = arith.constant 0 : i32
    return %c0_i32, %c0_i32_0 : i32, i32
  }
  func.func @transform_6(%arg0: i32) -> (i32, i32) {
    %c0_i32 = arith.constant 0 : i32
    %c0_i32_0 = arith.constant 0 : i32
    %c0_i32_1 = arith.constant 0 : i32
    return %c0_i32, %c0_i32_0 : i32, i32
  }
  func.func @transform_7(%arg0: i32) -> (i32, i32) {
    %c0_i32 = arith.constant 0 : i32
    %c0_i32_0 = arith.constant 0 : i32
    %c0_i32_1 = arith.constant 0 : i32
    return %c0_i32, %c0_i32_0 : i32, i32
  }
  func.func @transform_8(%arg0: i32) -> (i32, i32) {
    %c0_i32 = arith.constant 0 : i32
    %c0_i32_0 = arith.constant 0 : i32
    return %arg0, %c0_i32 : i32, i32
  }
}

</mosaic_0001>

<llo_original>
// kernel: tpu_custom_call.1
$region0: #{tpu_custom_call.1}
  #allocation0 [shape = 'u32[]', space=smem, size = 0x4, offset = 0x4, fixed_abs, tag = 'smem constant byte address 0x4 - core index']
  #allocation1 [shape = 'u32[72,128]{1,0:T(1,128)}', space=vmem, size = 0x9000, scoped, tag = 'internal scratch']
  #allocation2 [shape = 'f32[64,128]{1,0:T(8,128)}', space=vmem, size = 0x8000, scoped, tag = 'scratch operand']
  #allocation3 [shape = 'f32[1,1]{1,0:T(1,128)S(1)}', space=vmem, size = 0x200, scoped, tag = 'scoped memory for tpu_custom_call.1']
  %s0 = inlined_call_operand.hbm [shape: bf16[8,8,16], index: 0, kind: input, shape index: {}]
  %s1 = inlined_call_operand.hbm [shape: bf16[16,128], index: 1, kind: input, shape index: {}]
  %s2 = inlined_call_operand.hbm [shape: f32[32,128], index: 2, kind: input, shape index: {}]
  %s3 = inlined_call_operand.vmem [shape: f32[1,128], index: 3, kind: input, shape index: {}]
  %s4 = inlined_call_operand.hbm [shape: f32[8,128], index: 4, kind: input, shape index: {}]
  %s5 = inlined_call_operand.vmem [shape: f32[1,32], index: 5, kind: input, shape index: {}]
  %s6 = inlined_call_operand.vmem [shape: f32[1,128], index: 6, kind: input, shape index: {}]
  %s7 = inlined_call_operand.<no memory space> [shape: f32[1,1], index: 7, kind: input, shape index: {}]
  %s8 = inlined_call_operand.vmem [shape: f32[8,1], index: 8, kind: output, shape index: {}]
  %s9 = sld [smem:[#allocation0]]
  $region58: #{tpu_custom_call.1} parent=0
    _
  %s11 = ssub.s32 1, %s9
  %s12 = scalar_select 0, %s11, %s9
  %v13 = vstv %s7
  %14 = vst [vmem:[#allocation3] sm:$0x1] %v13
  $region1: #{tpu_custom_call.1} parent=0
    #allocation4 [shape = 'u8[16384]{0}', space=vmem, size = 0x4000, scoped, tag = 'input window, operand 0, single buffered']
    #allocation5 [shape = 's32[1]{0}', space=sflag, size = 0x4, scoped, tag = 'scoped memory for tpu_custom_call.1']
    #allocation6 [shape = 'u8[4096]{0}', space=vmem, size = 0x1000, scoped, tag = 'input window, operand 1, single buffered']
    #allocation7 [shape = 's32[1]{0}', space=sflag, size = 0x4, scoped, tag = 'scoped memory for tpu_custom_call.1']
    #allocation8 [shape = 'u8[16384]{0}', space=vmem, size = 0x4000, scoped, tag = 'input window, operand 2, single buffered']
    #allocation9 [shape = 'u8[4096]{0}', space=vmem, size = 0x1000, scoped, tag = 'input window, operand 4, single buffered']
    #allocation10 [shape = 's32[1]{0}', space=sflag, size = 0x4, scoped, tag = 'scoped memory for tpu_custom_call.1']
    %15 = vsyncpa [#allocation5], 0
    %16 = vsyncpa [#allocation7], 0
    %17 = vsyncpa [#allocation10], 0
    // Predicated region
    $region2: #{tpu_custom_call.1} parent=1 // pred_check
      _
    $region3: #{tpu_custom_call.1} parent=1 // pred_check_branch
      %19 = sbr.rel (0) target = $region5
    $region4: #{tpu_custom_call.1} parent=1 // pred_region
      %21 = vsyncadd [#allocation5], 0
      %s22 = sshll.u32 %s0, 4
      %s23 = int_to_ptr.hbm [resolvable:$true] %s22
      %s24 = sshll.u32 [#allocation4], 4
      %s25 = int_to_ptr.vmem [resolvable:$true] %s24
      %30 = dma.hbm_to_vmem [thread:$0]  %s23, 512, %s25, [#allocation5], 64, 64, 4
    $region5: #{tpu_custom_call.1} parent=1 // pred_fallthru
      _
    // Predicated region
    $region6: #{tpu_custom_call.1} parent=1 // pred_check
      _
    $region7: #{tpu_custom_call.1} parent=1 // pred_check_branch
      %32 = sbr.rel (0) target = $region9
    $region8: #{tpu_custom_call.1} parent=1 // pred_region
      %34 = vsyncadd [#allocation7], 0
      %s35 = sshll.u32 %s1, 4
      %s36 = int_to_ptr.hbm [resolvable:$true] %s35
      %s37 = sshll.u32 [#allocation6], 4
      %s38 = int_to_ptr.vmem [resolvable:$true] %s37
      %43 = dma.hbm_to_vmem [thread:$0]  %s36, 128, %s38, [#allocation7], 64, 64, 4
    $region9: #{tpu_custom_call.1} parent=1 // pred_fallthru
      _
    // Predicated region
    $region10: #{tpu_custom_call.1} parent=1 // pred_check
      _
    $region11: #{tpu_custom_call.1} parent=1 // pred_check_branch
      %45 = sbr.rel (0) target = $region13
    $region12: #{tpu_custom_call.1} parent=1 // pred_region
      %47 = vsyncadd [#allocation7], 0
      %s48 = sshll.u32 %s2, 4
      %s49 = int_to_ptr.hbm [resolvable:$true] %s48
      %s50 = sshll.u32 [#allocation8], 4
      %s51 = int_to_ptr.vmem [resolvable:$true] %s50
      %56 = dma.hbm_to_vmem [thread:$0]  %s49, 512, %s51, [#allocation7], 128, 128, 8
    $region13: #{tpu_custom_call.1} parent=1 // pred_fallthru
      _
    // Predicated region
    $region14: #{tpu_custom_call.1} parent=1 // pred_check
      _
    $region15: #{tpu_custom_call.1} parent=1 // pred_check_branch
      %58 = sbr.rel (0) target = $region17
    $region16: #{tpu_custom_call.1} parent=1 // pred_region
      _
    $region17: #{tpu_custom_call.1} parent=1 // pred_fallthru
      _
    // Predicated region
    $region18: #{tpu_custom_call.1} parent=1 // pred_check
      _
    $region19: #{tpu_custom_call.1} parent=1 // pred_check_branch
      %60 = sbr.rel (0) target = $region21
    $region20: #{tpu_custom_call.1} parent=1 // pred_region
      %62 = vsyncadd [#allocation10], 0
      %s64 = sshll.u32 %s4, 4
      %s65 = int_to_ptr.hbm [resolvable:$true] %s64
      %s66 = sshll.u32 [#allocation9], 4
      %s67 = int_to_ptr.vmem [resolvable:$true] %s66
      %69 = dma.hbm_to_vmem [thread:$0]  %s65, 128, %s67, [#allocation10]
    $region21: #{tpu_custom_call.1} parent=1 // pred_fallthru
      _
    // Predicated region
    $region22: #{tpu_custom_call.1} parent=1 // pred_check
      _
    $region23: #{tpu_custom_call.1} parent=1 // pred_check_branch
      %71 = sbr.rel (0) target = $region25
    $region24: #{tpu_custom_call.1} parent=1 // pred_region
      _
    $region25: #{tpu_custom_call.1} parent=1 // pred_fallthru
      _
    // Predicated region
    $region26: #{tpu_custom_call.1} parent=1 // pred_check
      _
    $region27: #{tpu_custom_call.1} parent=1 // pred_check_branch
      %73 = sbr.rel (0) target = $region29
    $region28: #{tpu_custom_call.1} parent=1 // pred_region
      _
    $region29: #{tpu_custom_call.1} parent=1 // pred_fallthru
      _
    // Predicated region
    $region30: #{tpu_custom_call.1} parent=1 // pred_check
      _
    $region31: #{tpu_custom_call.1} parent=1 // pred_check_branch
      %75 = sbr.rel (0) target = $region33
    $region32: #{tpu_custom_call.1} parent=1 // pred_region
      _
    $region33: #{tpu_custom_call.1} parent=1 // pred_fallthru
      _
    // Predicated region
    $region34: #{tpu_custom_call.1} parent=1 // pred_check
      _
    $region35: #{tpu_custom_call.1} parent=1 // pred_check_branch
      %77 = sbr.rel (0) target = $region37
    $region36: #{tpu_custom_call.1} parent=1 // pred_region
      %79 = dma.done [#allocation5], 512
    $region37: #{tpu_custom_call.1} parent=1 // pred_fallthru
      _
    // Predicated region
    $region38: #{tpu_custom_call.1} parent=1 // pred_check
      _
    $region39: #{tpu_custom_call.1} parent=1 // pred_check_branch
      %81 = sbr.rel (0) target = $region41
    $region40: #{tpu_custom_call.1} parent=1 // pred_region
      %83 = dma.done [#allocation7], 128
    $region41: #{tpu_custom_call.1} parent=1 // pred_fallthru
      _
    // Predicated region
    $region42: #{tpu_custom_call.1} parent=1 // pred_check
      _
    $region43: #{tpu_custom_call.1} parent=1 // pred_check_branch
      %85 = sbr.rel (0) target = $region45
    $region44: #{tpu_custom_call.1} parent=1 // pred_region
      %87 = dma.done [#allocation7], 512
    $region45: #{tpu_custom_call.1} parent=1 // pred_fallthru
      _
    // Predicated region
    $region46: #{tpu_custom_call.1} parent=1 // pred_check
      _
    $region47: #{tpu_custom_call.1} parent=1 // pred_check_branch
      %89 = sbr.rel (0) target = $region49
    $region48: #{tpu_custom_call.1} parent=1 // pred_region
      %91 = dma.done [#allocation10], 128
    $region49: #{tpu_custom_call.1} parent=1 // pred_fallthru
      _
    %v93 = vld [vmem:[#allocation4] sm:$0xf]
    %v94 = vld [vmem:[#allocation4 + $0x4] sm:$0xf]
    %v95 = vld [vmem:[#allocation4 + $0x8] sm:$0xf]
    %v96 = vld [vmem:[#allocation4 + $0xc] sm:$0xf]
    %v97 = vld [vmem:[#allocation4 + $0x10] sm:$0xf]
    %v98 = vld [vmem:[#allocation4 + $0x14] sm:$0xf]
    %v99 = vld [vmem:[#allocation4 + $0x18] sm:$0xf]
    %v100 = vld [vmem:[#allocation4 + $0x1c] sm:$0xf]
    %v101 = vld [vmem:[#allocation6] sm:$0xf]
    %v102 = vld [vmem:[#allocation6 + $0x4] sm:$0xf]
    %v103 = vld [vmem:[%s3] sm:$0x1]
    %v105 = vperm.slane %v103, 0
    %v115 = vunpack.c.l.b16 %v93
    %v116 = vunpack.c.l.b16 %v94
    %v117 = vunpack.c.l.b16 %v95
    %v118 = vunpack.c.l.b16 %v96
    %v119 = vunpack.c.l.b16 %v97
    %v120 = vunpack.c.l.b16 %v98
    %v121 = vunpack.c.l.b16 %v99
    %v122 = vunpack.c.l.b16 %v100
    %v123 = vpack.c.b16 %v116, %v115
    %v124 = vpack.c.b16 %v118, %v117
    %v125 = vpack.c.b16 %v120, %v119
    %v126 = vpack.c.b16 %v122, %v121
    %v129 = vunpack.c.l.b16 %v101
    %v130 = vunpack.c.l.b16 %v102
    %v131 = vpack.c.b16 %v130, %v129
    %vm133 = vcmask 130048
    %v135 = vsel %vm133, %v123, 0
    %v138 = vsel %vm133, %v124, 0
    %v141 = vsel %vm133, %v125, 0
    %v144 = vsel %vm133, %v126, 0
    %146 = vmatpush.bf16.msra.mxu0 0
    %147 = vmatpush.bf16.msra.mxu0 0
    %148 = vmatpush.bf16.msra.mxu0 0
    %149 = vmatpush.bf16.msra.mxu0 0
    %150 = vmatpush.bf16.msra.mxu0 0
    %151 = vmatpush.bf16.msra.mxu0 0
    %152 = vmatpush.bf16.msra.mxu0 0
    %153 = vmatpush.bf16.msra.mxu0 %v131
    %154 = vmatmul.bf16.gmra.mxu0 %v135
    %v155 = vpop.f32.mrf.mxu0
    %v156 = vadd.f32 %v105, %v155
    %v157 = vpop.f32.mrf.mxu0
    %v158 = vadd.f32 %v105, %v157
    %159 = vmatmul.bf16.gmra.mxu0 %v138
    %v160 = vpop.f32.mrf.mxu0
    %v161 = vadd.f32 %v105, %v160
    %v162 = vpop.f32.mrf.mxu0
    %v163 = vadd.f32 %v105, %v162
    %164 = vmatmul.bf16.gmra.mxu0 %v141
    %v165 = vpop.f32.mrf.mxu0
    %v166 = vadd.f32 %v105, %v165
    %v167 = vpop.f32.mrf.mxu0
    %v168 = vadd.f32 %v105, %v167
    %169 = vmatmul.bf16.gmra.mxu0 %v144
    %v170 = vpop.f32.mrf.mxu0
    %v171 = vadd.f32 %v105, %v170
    %v172 = vpop.f32.mrf.mxu0
    %v173 = vadd.f32 %v105, %v172
    %174 = vdwg.mxu0
    %175 = vst [vmem:[#allocation2] sm:$0xff] %v156
    %176 = vst [vmem:[#allocation2 + $0x8] sm:$0xff] %v158
    %177 = vst [vmem:[#allocation2 + $0x10] sm:$0xff] %v161
    %178 = vst [vmem:[#allocation2 + $0x18] sm:$0xff] %v163
    %179 = vst [vmem:[#allocation2 + $0x20] sm:$0xff] %v166
    %180 = vst [vmem:[#allocation2 + $0x28] sm:$0xff] %v168
    %181 = vst [vmem:[#allocation2 + $0x30] sm:$0xff] %v171
    %182 = vst [vmem:[#allocation2 + $0x38] sm:$0xff] %v173
    %v183 = vld [vmem:[#allocation8] sm:$0xff]
    %v184 = vld [vmem:[#allocation8 + $0x8] sm:$0xff]
    %v185 = vld [vmem:[#allocation8 + $0x10] sm:$0xff]
    %v186 = vld [vmem:[#allocation8 + $0x18] sm:$0xff]
    %v187 = vlaneseq
    %v188 = vand.u32 %v187, 127
    %vm189 = vcmp.ge.s32.totalorder %v188, 64
    %vm190 = vcmp.lt.s32.totalorder %v188, 96
    %vm191 = vmand %vm189, %vm190
    %v192 = vld [vmem:[#allocation2] sm:$0xff]
    %vm193 = vcmask 261120
    %v195 = vsel %vm193, 0.0, 0
    %197 = vmatpush.msra.mxu0 0.0
    %198 = vmatpush.msra.mxu0 0.0
    %199 = vmatpush.msra.mxu0 0.0
    %200 = vmatpush.msra.mxu0 0.0
    %201 = vmatpush.msra.mxu0 0.0
    %202 = vmatpush.msra.mxu0 0.0
    %203 = vmatpush.msra.mxu0 0.0
    %204 = vmatpush.msra.mxu0 0.0
    %205 = vmatpush.msra.mxu0 0.0
    %206 = vmatpush.msra.mxu0 0.0
    %207 = vmatpush.msra.mxu0 0.0
    %208 = vmatpush.msra.mxu0 0.0
    %209 = vmatpush.msra.mxu0 %v186
    %210 = vmatpush.msra.mxu0 %v185
    %211 = vmatpush.msra.mxu0 %v184
    %212 = vmatpush.msra.mxu0 %v183
    %213 = vmatmul.f32.gmra.mxu0 %v195
    %v214 = vpop.f32.mrf.mxu0
    %v215 = vadd.f32 0.0, %v214
    %216 = vdwg.mxu0
    %v217 = vadd.f32 %v192, %v215
    %v218 = vtanh.pop %v217
    %v219 = vxor.u32 %v217, 2147483648
    %v220 = vmul.f32 %v219, 1.442695
    %v221 = vpow.pop %v220
    %v222 = vadd.f32 %v221, 1.0
    %v223 = vrcp.pop %v222
    %v224 = vmul.f32 %v222, %v223
    %v225 = vsub.f32 1.0, %v224
    %v226 = vmul.f32 %v223, %v225
    %v227 = vadd.f32 %v223, %v226
    %vm228 = vweird.f32 %v222
    %vm229 = vweird.f32 %v223
    %vm230 = vmor %vm228, %vm229
    %v231 = vsel %vm230, %v223, %v227
    %v232 = vand.u32 2147483647, %v222
    %vm233 = vcmp.eq.f32.partialorder %v232, 8.507059e+37
    %v234 = vand.u32 %v222, 2147483648
    %v235 = vor.u32 1.1754944e-38, %v234
    %v236 = vsel %vm233, %v235, %v231
    %v237 = vmul.f32 1.0, %v236
    %v238 = vsel %vm191, %v218, %v237
    %v239 = vmul.f32 %v238, 0.0
    %241 = vrot.lane.b32.xlu0 %v238, 64
    %v242 = vpop.permute.xlu0 %241
    %v244 = vmul.f32 %v238, %v242
    %246 = vrot.lane.b32.xlu0 %v244, 32
    %v247 = vpop.permute.xlu0 %246
    %v249 = vadd.f32 %v239, %v247
    %v250 = vtanh.pop %v249
    %252 = vrot.lane.b32.xlu0 %v250, 64
    %v253 = vpop.permute.xlu0 %252
    %v255 = vmul.f32 %v238, %v253
    %s256 = scalar_lea.vmem [#allocation2], 8
    %v257 = vld [vmem:[%s256] sm:$0xff]
    %259 = vrot.lane.b32.xlu0 %v255, 32
    %v260 = vpop.permute.xlu0 %259
    %v261 = vsel %vm193, %v260, 0
    %263 = vmatpush.msra.mxu0 0.0
    %264 = vmatpush.msra.mxu0 0.0
    %265 = vmatpush.msra.mxu0 0.0
    %266 = vmatpush.msra.mxu0 0.0
    %267 = vmatpush.msra.mxu0 0.0
    %268 = vmatpush.msra.mxu0 0.0
    %269 = vmatpush.msra.mxu0 0.0
    %270 = vmatpush.msra.mxu0 0.0
    %271 = vmatpush.msra.mxu0 0.0
    %272 = vmatpush.msra.mxu0 0.0
    %273 = vmatpush.msra.mxu0 0.0
    %274 = vmatpush.msra.mxu0 0.0
    %275 = vmatpush.msra.mxu0 %v186
    %276 = vmatpush.msra.mxu0 %v185
    %277 = vmatpush.msra.mxu0 %v184
    %278 = vmatpush.msra.mxu0 %v183
    %279 = vmatmul.f32.gmra.mxu0 %v261
    %v280 = vpop.f32.mrf.mxu0
    %v281 = vadd.f32 0.0, %v280
    %282 = vdwg.mxu0
    %v283 = vadd.f32 %v257, %v281
    %v284 = vtanh.pop %v283
    %v285 = vxor.u32 %v283, 2147483648
    %v286 = vmul.f32 %v285, 1.442695
    %v287 = vpow.pop %v286
    %v288 = vadd.f32 %v287, 1.0
    %v289 = vrcp.pop %v288
    %v290 = vmul.f32 %v288, %v289
    %v291 = vsub.f32 1.0, %v290
    %v292 = vmul.f32 %v289, %v291
    %v293 = vadd.f32 %v289, %v292
    %vm294 = vweird.f32 %v288
    %vm295 = vweird.f32 %v289
    %vm296 = vmor %vm294, %vm295
    %v297 = vsel %vm296, %v289, %v293
    %v298 = vand.u32 2147483647, %v288
    %vm299 = vcmp.eq.f32.partialorder %v298, 8.507059e+37
    %v300 = vand.u32 %v288, 2147483648
    %v301 = vor.u32 1.1754944e-38, %v300
    %v302 = vsel %vm299, %v301, %v297
    %v303 = vmul.f32 1.0, %v302
    %v304 = vsel %vm191, %v284, %v303
    %v305 = vmul.f32 %v304, %v249
    %307 = vrot.lane.b32.xlu0 %v304, 64
    %v308 = vpop.permute.xlu0 %307
    %v310 = vmul.f32 %v304, %v308
    %312 = vrot.lane.b32.xlu0 %v310, 32
    %v313 = vpop.permute.xlu0 %312
    %v315 = vadd.f32 %v305, %v313
    %v316 = vtanh.pop %v315
    %318 = vrot.lane.b32.xlu0 %v316, 64
    %v319 = vpop.permute.xlu0 %318
    %v321 = vmul.f32 %v304, %v319
    %s322 = scalar_lea.vmem [#allocation2], 16
    %v323 = vld [vmem:[%s322] sm:$0xff]
    %325 = vrot.lane.b32.xlu0 %v321, 32
    %v326 = vpop.permute.xlu0 %325
    %v327 = vsel %vm193, %v326, 0
    %329 = vmatpush.msra.mxu0 0.0
    %330 = vmatpush.msra.mxu0 0.0
    %331 = vmatpush.msra.mxu0 0.0
    %332 = vmatpush.msra.mxu0 0.0
    %333 = vmatpush.msra.mxu0 0.0
    %334 = vmatpush.msra.mxu0 0.0
    %335 = vmatpush.msra.mxu0 0.0
    %336 = vmatpush.msra.mxu0 0.0
    %337 = vmatpush.msra.mxu0 0.0
    %338 = vmatpush.msra.mxu0 0.0
    %339 = vmatpush.msra.mxu0 0.0
    %340 = vmatpush.msra.mxu0 0.0
    %341 = vmatpush.msra.mxu0 %v186
    %342 = vmatpush.msra.mxu0 %v185
    %343 = vmatpush.msra.mxu0 %v184
    %344 = vmatpush.msra.mxu0 %v183
    %345 = vmatmul.f32.gmra.mxu0 %v327
    %v346 = vpop.f32.mrf.mxu0
    %v347 = vadd.f32 0.0, %v346
    %348 = vdwg.mxu0
    %v349 = vadd.f32 %v323, %v347
    %v350 = vtanh.pop %v349
    %v351 = vxor.u32 %v349, 2147483648
    %v352 = vmul.f32 %v351, 1.442695
    %v353 = vpow.pop %v352
    %v354 = vadd.f32 %v353, 1.0
    %v355 = vrcp.pop %v354
    %v356 = vmul.f32 %v354, %v355
    %v357 = vsub.f32 1.0, %v356
    %v358 = vmul.f32 %v355, %v357
    %v359 = vadd.f32 %v355, %v358
    %vm360 = vweird.f32 %v354
    %vm361 = vweird.f32 %v355
    %vm362 = vmor %vm360, %vm361
    %v363 = vsel %vm362, %v355, %v359
    %v364 = vand.u32 2147483647, %v354
    %vm365 = vcmp.eq.f32.partialorder %v364, 8.507059e+37
    %v366 = vand.u32 %v354, 2147483648
    %v367 = vor.u32 1.1754944e-38, %v366
    %v368 = vsel %vm365, %v367, %v363
    %v369 = vmul.f32 1.0, %v368
    %v370 = vsel %vm191, %v350, %v369
    %v371 = vmul.f32 %v370, %v315
    %373 = vrot.lane.b32.xlu0 %v370, 64
    %v374 = vpop.permute.xlu0 %373
    %v376 = vmul.f32 %v370, %v374
    %378 = vrot.lane.b32.xlu0 %v376, 32
    %v379 = vpop.permute.xlu0 %378
    %v381 = vadd.f32 %v371, %v379
    %v382 = vtanh.pop %v381
    %384 = vrot.lane.b32.xlu0 %v382, 64
    %v385 = vpop.permute.xlu0 %384
    %v387 = vmul.f32 %v370, %v385
    %s388 = scalar_lea.vmem [#allocation2], 24
    %v389 = vld [vmem:[%s388] sm:$0xff]
    %391 = vrot.lane.b32.xlu0 %v387, 32
    %v392 = vpop.permute.xlu0 %391
    %v393 = vsel %vm193, %v392, 0
    %395 = vmatpush.msra.mxu0 0.0
    %396 = vmatpush.msra.mxu0 0.0
    %397 = vmatpush.msra.mxu0 0.0
    %398 = vmatpush.msra.mxu0 0.0
    %399 = vmatpush.msra.mxu0 0.0
    %400 = vmatpush.msra.mxu0 0.0
    %401 = vmatpush.msra.mxu0 0.0
    %402 = vmatpush.msra.mxu0 0.0
    %403 = vmatpush.msra.mxu0 0.0
    %404 = vmatpush.msra.mxu0 0.0
    %405 = vmatpush.msra.mxu0 0.0
    %406 = vmatpush.msra.mxu0 0.0
    %407 = vmatpush.msra.mxu0 %v186
    %408 = vmatpush.msra.mxu0 %v185
    %409 = vmatpush.msra.mxu0 %v184
    %410 = vmatpush.msra.mxu0 %v183
    %411 = vmatmul.f32.gmra.mxu0 %v393
    %v412 = vpop.f32.mrf.mxu0
    %v413 = vadd.f32 0.0, %v412
    %414 = vdwg.mxu0
    %v415 = vadd.f32 %v389, %v413
    %v416 = vtanh.pop %v415
    %v417 = vxor.u32 %v415, 2147483648
    %v418 = vmul.f32 %v417, 1.442695
    %v419 = vpow.pop %v418
    %v420 = vadd.f32 %v419, 1.0
    %v421 = vrcp.pop %v420
    %v422 = vmul.f32 %v420, %v421
    %v423 = vsub.f32 1.0, %v422
    %v424 = vmul.f32 %v421, %v423
    %v425 = vadd.f32 %v421, %v424
    %vm426 = vweird.f32 %v420
    %vm427 = vweird.f32 %v421
    %vm428 = vmor %vm426, %vm427
    %v429 = vsel %vm428, %v421, %v425
    %v430 = vand.u32 2147483647, %v420
    %vm431 = vcmp.eq.f32.partialorder %v430, 8.507059e+37
    %v432 = vand.u32 %v420, 2147483648
    %v433 = vor.u32 1.1754944e-38, %v432
    %v434 = vsel %vm431, %v433, %v429
    %v435 = vmul.f32 1.0, %v434
    %v436 = vsel %vm191, %v416, %v435
    %v437 = vmul.f32 %v436, %v381
    %439 = vrot.lane.b32.xlu0 %v436, 64
    %v440 = vpop.permute.xlu0 %439
    %v442 = vmul.f32 %v436, %v440
    %444 = vrot.lane.b32.xlu0 %v442, 32
    %v445 = vpop.permute.xlu0 %444
    %v447 = vadd.f32 %v437, %v445
    %v448 = vtanh.pop %v447
    %450 = vrot.lane.b32.xlu0 %v448, 64
    %v451 = vpop.permute.xlu0 %450
    %v453 = vmul.f32 %v436, %v451
    %s454 = scalar_lea.vmem [#allocation2], 32
    %v455 = vld [vmem:[%s454] sm:$0xff]
    %457 = vrot.lane.b32.xlu0 %v453, 32
    %v458 = vpop.permute.xlu0 %457
    %v459 = vsel %vm193, %v458, 0
    %461 = vmatpush.msra.mxu0 0.0
    %462 = vmatpush.msra.mxu0 0.0
    %463 = vmatpush.msra.mxu0 0.0
    %464 = vmatpush.msra.mxu0 0.0
    %465 = vmatpush.msra.mxu0 0.0
    %466 = vmatpush.msra.mxu0 0.0
    %467 = vmatpush.msra.mxu0 0.0
    %468 = vmatpush.msra.mxu0 0.0
    %469 = vmatpush.msra.mxu0 0.0
    %470 = vmatpush.msra.mxu0 0.0
    %471 = vmatpush.msra.mxu0 0.0
    %472 = vmatpush.msra.mxu0 0.0
    %473 = vmatpush.msra.mxu0 %v186
    %474 = vmatpush.msra.mxu0 %v185
    %475 = vmatpush.msra.mxu0 %v184
    %476 = vmatpush.msra.mxu0 %v183
    %477 = vmatmul.f32.gmra.mxu0 %v459
    %v478 = vpop.f32.mrf.mxu0
    %v479 = vadd.f32 0.0, %v478
    %480 = vdwg.mxu0
    %v481 = vadd.f32 %v455, %v479
    %v482 = vtanh.pop %v481
    %v483 = vxor.u32 %v481, 2147483648
    %v484 = vmul.f32 %v483, 1.442695
    %v485 = vpow.pop %v484
    %v486 = vadd.f32 %v485, 1.0
    %v487 = vrcp.pop %v486
    %v488 = vmul.f32 %v486, %v487
    %v489 = vsub.f32 1.0, %v488
    %v490 = vmul.f32 %v487, %v489
    %v491 = vadd.f32 %v487, %v490
    %vm492 = vweird.f32 %v486
    %vm493 = vweird.f32 %v487
    %vm494 = vmor %vm492, %vm493
    %v495 = vsel %vm494, %v487, %v491
    %v496 = vand.u32 2147483647, %v486
    %vm497 = vcmp.eq.f32.partialorder %v496, 8.507059e+37
    %v498 = vand.u32 %v486, 2147483648
    %v499 = vor.u32 1.1754944e-38, %v498
    %v500 = vsel %vm497, %v499, %v495
    %v501 = vmul.f32 1.0, %v500
    %v502 = vsel %vm191, %v482, %v501
    %v503 = vmul.f32 %v502, %v447
    %505 = vrot.lane.b32.xlu0 %v502, 64
    %v506 = vpop.permute.xlu0 %505
    %v508 = vmul.f32 %v502, %v506
    %510 = vrot.lane.b32.xlu0 %v508, 32
    %v511 = vpop.permute.xlu0 %510
    %v513 = vadd.f32 %v503, %v511
    %v514 = vtanh.pop %v513
    %516 = vrot.lane.b32.xlu0 %v514, 64
    %v517 = vpop.permute.xlu0 %516
    %v519 = vmul.f32 %v502, %v517
    %s520 = scalar_lea.vmem [#allocation2], 40
    %v521 = vld [vmem:[%s520] sm:$0xff]
    %523 = vrot.lane.b32.xlu0 %v519, 32
    %v524 = vpop.permute.xlu0 %523
    %v525 = vsel %vm193, %v524, 0
    %527 = vmatpush.msra.mxu0 0.0
    %528 = vmatpush.msra.mxu0 0.0
    %529 = vmatpush.msra.mxu0 0.0
    %530 = vmatpush.msra.mxu0 0.0
    %531 = vmatpush.msra.mxu0 0.0
    %532 = vmatpush.msra.mxu0 0.0
    %533 = vmatpush.msra.mxu0 0.0
    %534 = vmatpush.msra.mxu0 0.0
    %535 = vmatpush.msra.mxu0 0.0
    %536 = vmatpush.msra.mxu0 0.0
    %537 = vmatpush.msra.mxu0 0.0
    %538 = vmatpush.msra.mxu0 0.0
    %539 = vmatpush.msra.mxu0 %v186
    %540 = vmatpush.msra.mxu0 %v185
    %541 = vmatpush.msra.mxu0 %v184
    %542 = vmatpush.msra.mxu0 %v183
    %543 = vmatmul.f32.gmra.mxu0 %v525
    %v544 = vpop.f32.mrf.mxu0
    %v545 = vadd.f32 0.0, %v544
    %546 = vdwg.mxu0
    %v547 = vadd.f32 %v521, %v545
    %v548 = vtanh.pop %v547
    %v549 = vxor.u32 %v547, 2147483648
    %v550 = vmul.f32 %v549, 1.442695
    %v551 = vpow.pop %v550
    %v552 = vadd.f32 %v551, 1.0
    %v553 = vrcp.pop %v552
    %v554 = vmul.f32 %v552, %v553
    %v555 = vsub.f32 1.0, %v554
    %v556 = vmul.f32 %v553, %v555
    %v557 = vadd.f32 %v553, %v556
    %vm558 = vweird.f32 %v552
    %vm559 = vweird.f32 %v553
    %vm560 = vmor %vm558, %vm559
    %v561 = vsel %vm560, %v553, %v557
    %v562 = vand.u32 2147483647, %v552
    %vm563 = vcmp.eq.f32.partialorder %v562, 8.507059e+37
    %v564 = vand.u32 %v552, 2147483648
    %v565 = vor.u32 1.1754944e-38, %v564
    %v566 = vsel %vm563, %v565, %v561
    %v567 = vmul.f32 1.0, %v566
    %v568 = vsel %vm191, %v548, %v567
    %v569 = vmul.f32 %v568, %v513
    %571 = vrot.lane.b32.xlu0 %v568, 64
    %v572 = vpop.permute.xlu0 %571
    %v574 = vmul.f32 %v568, %v572
    %576 = vrot.lane.b32.xlu0 %v574, 32
    %v577 = vpop.permute.xlu0 %576
    %v579 = vadd.f32 %v569, %v577
    %v580 = vtanh.pop %v579
    %582 = vrot.lane.b32.xlu0 %v580, 64
    %v583 = vpop.permute.xlu0 %582
    %v585 = vmul.f32 %v568, %v583
    %s586 = scalar_lea.vmem [#allocation2], 48
    %v587 = vld [vmem:[%s586] sm:$0xff]
    %589 = vrot.lane.b32.xlu0 %v585, 32
    %v590 = vpop.permute.xlu0 %589
    %v591 = vsel %vm193, %v590, 0
    %593 = vmatpush.msra.mxu0 0.0
    %594 = vmatpush.msra.mxu0 0.0
    %595 = vmatpush.msra.mxu0 0.0
    %596 = vmatpush.msra.mxu0 0.0
    %597 = vmatpush.msra.mxu0 0.0
    %598 = vmatpush.msra.mxu0 0.0
    %599 = vmatpush.msra.mxu0 0.0
    %600 = vmatpush.msra.mxu0 0.0
    %601 = vmatpush.msra.mxu0 0.0
    %602 = vmatpush.msra.mxu0 0.0
    %603 = vmatpush.msra.mxu0 0.0
    %604 = vmatpush.msra.mxu0 0.0
    %605 = vmatpush.msra.mxu0 %v186
    %606 = vmatpush.msra.mxu0 %v185
    %607 = vmatpush.msra.mxu0 %v184
    %608 = vmatpush.msra.mxu0 %v183
    %609 = vmatmul.f32.gmra.mxu0 %v591
    %v610 = vpop.f32.mrf.mxu0
    %v611 = vadd.f32 0.0, %v610
    %612 = vdwg.mxu0
    %v613 = vadd.f32 %v587, %v611
    %v614 = vtanh.pop %v613
    %v615 = vxor.u32 %v613, 2147483648
    %v616 = vmul.f32 %v615, 1.442695
    %v617 = vpow.pop %v616
    %v618 = vadd.f32 %v617, 1.0
    %v619 = vrcp.pop %v618
    %v620 = vmul.f32 %v618, %v619
    %v621 = vsub.f32 1.0, %v620
    %v622 = vmul.f32 %v619, %v621
    %v623 = vadd.f32 %v619, %v622
    %vm624 = vweird.f32 %v618
    %vm625 = vweird.f32 %v619
    %vm626 = vmor %vm624, %vm625
    %v627 = vsel %vm626, %v619, %v623
    %v628 = vand.u32 2147483647, %v618
    %vm629 = vcmp.eq.f32.partialorder %v628, 8.507059e+37
    %v630 = vand.u32 %v618, 2147483648
    %v631 = vor.u32 1.1754944e-38, %v630
    %v632 = vsel %vm629, %v631, %v627
    %v633 = vmul.f32 1.0, %v632
    %v634 = vsel %vm191, %v614, %v633
    %v635 = vmul.f32 %v634, %v579
    %637 = vrot.lane.b32.xlu0 %v634, 64
    %v638 = vpop.permute.xlu0 %637
    %v640 = vmul.f32 %v634, %v638
    %642 = vrot.lane.b32.xlu0 %v640, 32
    %v643 = vpop.permute.xlu0 %642
    %v645 = vadd.f32 %v635, %v643
    %v646 = vtanh.pop %v645
    %648 = vrot.lane.b32.xlu0 %v646, 64
    %v649 = vpop.permute.xlu0 %648
    %v651 = vmul.f32 %v634, %v649
    %s652 = scalar_lea.vmem [#allocation2], 56
    %v653 = vld [vmem:[%s652] sm:$0xff]
    %655 = vrot.lane.b32.xlu0 %v651, 32
    %v656 = vpop.permute.xlu0 %655
    %v657 = vsel %vm193, %v656, 0
    %659 = vmatpush.msra.mxu0 0.0
    %660 = vmatpush.msra.mxu0 0.0
    %661 = vmatpush.msra.mxu0 0.0
    %662 = vmatpush.msra.mxu0 0.0
    %663 = vmatpush.msra.mxu0 0.0
    %664 = vmatpush.msra.mxu0 0.0
    %665 = vmatpush.msra.mxu0 0.0
    %666 = vmatpush.msra.mxu0 0.0
    %667 = vmatpush.msra.mxu0 0.0
    %668 = vmatpush.msra.mxu0 0.0
    %669 = vmatpush.msra.mxu0 0.0
    %670 = vmatpush.msra.mxu0 0.0
    %671 = vmatpush.msra.mxu0 %v186
    %672 = vmatpush.msra.mxu0 %v185
    %673 = vmatpush.msra.mxu0 %v184
    %674 = vmatpush.msra.mxu0 %v183
    %675 = vmatmul.f32.gmra.mxu0 %v657
    %v676 = vpop.f32.mrf.mxu0
    %v677 = vadd.f32 0.0, %v676
    %678 = vdwg.mxu0
    %v679 = vadd.f32 %v653, %v677
    %v680 = vtanh.pop %v679
    %v681 = vxor.u32 %v679, 2147483648
    %v682 = vmul.f32 %v681, 1.442695
    %v683 = vpow.pop %v682
    %v684 = vadd.f32 %v683, 1.0
    %v685 = vrcp.pop %v684
    %v686 = vmul.f32 %v684, %v685
    %v687 = vsub.f32 1.0, %v686
    %v688 = vmul.f32 %v685, %v687
    %v689 = vadd.f32 %v685, %v688
    %vm690 = vweird.f32 %v684
    %vm691 = vweird.f32 %v685
    %vm692 = vmor %vm690, %vm691
    %v693 = vsel %vm692, %v685, %v689
    %v694 = vand.u32 2147483647, %v684
    %vm695 = vcmp.eq.f32.partialorder %v694, 8.507059e+37
    %v696 = vand.u32 %v684, 2147483648
    %v697 = vor.u32 1.1754944e-38, %v696
    %v698 = vsel %vm695, %v697, %v693
    %v699 = vmul.f32 1.0, %v698
    %v700 = vsel %vm191, %v680, %v699
    %v701 = vmul.f32 %v700, %v645
    %703 = vrot.lane.b32.xlu0 %v700, 64
    %v704 = vpop.permute.xlu0 %703
    %v706 = vmul.f32 %v700, %v704
    %708 = vrot.lane.b32.xlu0 %v706, 32
    %v709 = vpop.permute.xlu0 %708
    %v711 = vadd.f32 %v701, %v709
    %v712 = vtanh.pop %v711
    %714 = vrot.lane.b32.xlu0 %v712, 64
    %v715 = vpop.permute.xlu0 %714
    %v717 = vmul.f32 %v700, %v715
    %v718 = vld [vmem:[%s5] sm:$0x1]
    %v720 = vperm.slane %v718, 0
    %721 = vrot.lane.b32.xlu0 %v720, 96
    %v722 = vpop.permute.xlu0 %721
    %v724 = vmul.f32 %v717, %v722
    %726 = vrot.lane.b32.xlu0 %v724, 32
    %v727 = vpop.permute.xlu0 %726
    %v729 = vsel %vm193, %v727, 0.0
    %730 = vadd.xlane.f32.xlu0 %v729
    %v731 = vpop.xlane.xlu0 %730
    %v732 = vld [vmem:[#allocation9] sm:$0xff]
    %v733 = vld [vmem:[%s6] sm:$0x1]
    %v735 = vperm.slane %v733, 0
    %v737 = vmul.f32 %v732, %v735
    %738 = vadd.xlane.f32.xlu0 %v737
    %v739 = vpop.xlane.xlu0 %738
    %v740 = vadd.f32 %v731, %v739
    %v741 = vld [vmem:[#allocation3] sm:$0x1]
    %v743 = vperm.slane %v741, 0
    %v745 = vadd.f32 %v740, %v743
    %v746 = vxor.u32 %v745, 2147483648
    %v747 = vmul.f32 %v746, 1.442695
    %v748 = vpow.pop %v747
    %v749 = vadd.f32 %v748, 1.0
    %v750 = vrcp.pop %v749
    %v751 = vmul.f32 %v749, %v750
    %v752 = vsub.f32 1.0, %v751
    %v753 = vmul.f32 %v750, %v752
    %v754 = vadd.f32 %v750, %v753
    %vm755 = vweird.f32 %v749
    %vm756 = vweird.f32 %v750
    %vm757 = vmor %vm755, %vm756
    %v758 = vsel %vm757, %v750, %v754
    %v759 = vand.u32 2147483647, %v749
    %vm760 = vcmp.eq.f32.partialorder %v759, 8.507059e+37
    %v761 = vand.u32 %v749, 2147483648
    %v762 = vor.u32 1.1754944e-38, %v761
    %v763 = vsel %vm760, %v762, %v758
    %v764 = vmul.f32 1.0, %v763
    %vm765 = vcmask 7168
    %766 = vst.msk [vmem:[%s8] sm:$0xff] %vm765, %v764
    // Predicated region
    $region50: #{tpu_custom_call.1} parent=1 // pred_check
      _
    $region51: #{tpu_custom_call.1} parent=1 // pred_check_branch
      %768 = sbr.rel (0) target = $region53
    $region52: #{tpu_custom_call.1} parent=1 // pred_region
      _
    $region53: #{tpu_custom_call.1} parent=1 // pred_fallthru
      _
    // Predicated region
    $region54: #{tpu_custom_call.1} parent=1 // pred_check
      _
    $region55: #{tpu_custom_call.1} parent=1 // pred_check_branch
      %770 = sbr.rel (0) target = $region57
    $region56: #{tpu_custom_call.1} parent=1 // pred_region
      _
    $region57: #{tpu_custom_call.1} parent=1 // pred_fallthru
      _
    %771 = vsyncpa [#allocation5], 1
    %772 = vsyncpa [#allocation7], 1
    %773 = vsyncpa [#allocation10], 1

</llo_original>
